<compile_context>
chip_gen: v7x
topology: tpu7x:2x2x1
jax: 0.10.0
libtpu: 0.0.40
codegen_flags: <defaults>
</compile_context>

<pallas_src>
import jax
import jax.numpy as jnp
from jax.experimental import pallas as pl
from jax.experimental.pallas import tpu as pltpu


def _lstm_seq_kernel(x_ref, h0_ref, c0_ref,
                     wih_t_ref, whh_t_ref, b_ref,
                     wfc_t_ref, bfc_ref,
                     y_ref, h_out_ref, c_out_ref,
                     gx_ref, hs_ref):
    T = x_ref.shape[0]
    H = h0_ref.shape[-1]

    # 1) Batched input projection for the whole sequence (MXU-friendly M=T):
    #    gates_x = X @ W_ih^T + (b_ih + b_hh)                      -> (T, 4H)
    gx_ref[...] = (jnp.dot(x_ref[...], wih_t_ref[...],
                           preferred_element_type=jnp.float32) + b_ref[...])

    # 2) Per-lane constants for the single-tanh gate trick (hoisted out of the
    #    loop; JAX does not CSE broadcasts inside loops).
    #    sigmoid(x) = 0.5 * (1 + tanh(0.5 * x))  for the i/f/o lanes,
    #    plain tanh(x) for the g lanes.
    lane = jax.lax.broadcasted_iota(jnp.int32, (1, 4 * H), 1)
    is_g = (lane >= 2 * H) & (lane < 3 * H)
    pre = jnp.where(is_g, 1.0, 0.5).astype(jnp.float32)       # tanh pre-scale
    post_mul = pre                                             # same 0.5/1.0 pattern
    post_add = jnp.where(is_g, 0.0, 0.5).astype(jnp.float32)

    whh_t = whh_t_ref[...]                                     # (H, 4H), VMEM-resident

    def step(t, carry):
        h, c = carry
        # Only the recurrent matmul stays on the serial path.
        gates = gx_ref[pl.ds(t, 1), :] + jnp.dot(
            h, whh_t, preferred_element_type=jnp.float32)       # (1, 4H)
        act = jnp.tanh(gates * pre) * post_mul + post_add        # one EUP pass
        i_g = act[:, 0 * H:1 * H]
        f_g = act[:, 1 * H:2 * H]
        g_g = act[:, 2 * H:3 * H]
        o_g = act[:, 3 * H:4 * H]
        c_new = f_g * c + i_g * g_g
        h_new = o_g * jnp.tanh(c_new)
        hs_ref[pl.ds(t, 1), :] = h_new                           # stash for batched FC
        return h_new, c_new

    h_fin, c_fin = jax.lax.fori_loop(
        0, T, step, (h0_ref[...], c0_ref[...]), unroll=True)

    h_out_ref[...] = h_fin
    c_out_ref[...] = c_fin

    # 3) Batched, lane-dense FC + tanh over all steps: (T, H) @ (H, OUT_PAD).
    y_ref[...] = jnp.tanh(
        jnp.dot(hs_ref[...], wfc_t_ref[...],
                preferred_element_type=jnp.float32) + bfc_ref[...])


def _build_lstm_seq_call(T, H, out_pad):
    vmem = pl.BlockSpec(memory_space=pltpu.MemorySpace.VMEM)
    return pl.pallas_call(
        _lstm_seq_kernel,
        out_shape=(
            jax.ShapeDtypeStruct((T, out_pad), jnp.float32),   # y (lane-dense)
            jax.ShapeDtypeStruct((1, H), jnp.float32),         # h_final
            jax.ShapeDtypeStruct((1, H), jnp.float32),         # c_final
        ),
        in_specs=[vmem] * 8,
        out_specs=(vmem, vmem, vmem),
        scratch_shapes=[
            pltpu.VMEM((T, 4 * H), jnp.float32),               # gates_x
            pltpu.VMEM((T, H), jnp.float32),                   # per-step hidden
        ],
        # h0 -> h_final, c0 -> c_final (no extra state round-trips).
        input_output_aliases={1: 1, 2: 2},
    )


class LSTMControllerPallas:
    """JAX/Pallas port of the PyTorch LSTMController (output_activation='tanh')."""

    def __init__(self, input_dim, num_hidden, output_dim, key,
                 output_activation="tanh"):
        if output_activation != "tanh":
            # TODO(synk): only output_activation='tanh' (the module default) is implemented.
            raise ValueError("unsupported activation function")
        self.input_dim = input_dim
        self.hidden = num_hidden
        self.output_dim = output_dim
        self.out_pad = max(128, -(-output_dim // 128) * 128)

        k = 1.0 / jnp.sqrt(jnp.float32(num_hidden))
        ks = jax.random.split(key, 6)
        # PyTorch param shapes: W_ih (4H, D), W_hh (4H, H), b_ih/b_hh (4H,),
        #                       W_fc (out, H), b_fc (out,)
        w_ih = jax.random.uniform(ks[0], (4 * num_hidden, input_dim),
                                  jnp.float32, -k, k)
        w_hh = jax.random.uniform(ks[1], (4 * num_hidden, num_hidden),
                                  jnp.float32, -k, k)
        b_ih = jax.random.uniform(ks[2], (4 * num_hidden,), jnp.float32, -k, k)
        b_hh = jax.random.uniform(ks[3], (4 * num_hidden,), jnp.float32, -k, k)
        w_fc = jax.random.uniform(ks[4], (output_dim, num_hidden),
                                  jnp.float32, -k, k)
        b_fc = jax.random.uniform(ks[5], (output_dim,), jnp.float32, -k, k)

        # Pre-transposed for row-vector matmuls inside the kernel.
        self.wih_t = jnp.asarray(w_ih.T)                       # (D, 4H)
        self.whh_t = jnp.asarray(w_hh.T)                       # (H, 4H)
        self.b = (b_ih + b_hh).reshape(1, 4 * num_hidden)      # (1, 4H)
        self.wfc_t = jnp.asarray(w_fc.T)                       # (H, out)   (reference)
        self.bfc = b_fc.reshape(1, output_dim)                 # (1, out)   (reference)
        # Lane-dense (zero-padded) FC weights used by the kernel.
        self.wfc_t_pad = jnp.zeros((num_hidden, self.out_pad),
                                   jnp.float32).at[:, :output_dim].set(self.wfc_t)
        self.bfc_pad = jnp.zeros((1, self.out_pad),
                                 jnp.float32).at[:, :output_dim].set(self.bfc)

        self._fns = {}    # cached jitted callables, keyed by sequence length T
        self.reset()

    def reset(self):
        self._hidden = (jnp.zeros((1, self.hidden), jnp.float32),
                        jnp.zeros((1, self.hidden), jnp.float32))

    def _get_fn(self, T):
        fn = self._fns.get(T)
        if fn is None:
            pcall = _build_lstm_seq_call(T, self.hidden, self.out_pad)
            out_dim = self.output_dim

            @jax.jit
            def run(x_seq, h, c, wih_t, whh_t, b, wfc_t_pad, bfc_pad):
                y_pad, h_new, c_new = pcall(x_seq, h, c, wih_t, whh_t, b,
                                            wfc_t_pad, bfc_pad)
                return y_pad[:, :out_dim], h_new, c_new

            fn = run
            self._fns[T] = fn
        return fn

    def forward_sequence(self, x_seq):
        """Run T fused timesteps (== T successive torch forward() calls).

        x_seq: (T, input_dim). Returns (T, 1, output_dim), updates recurrent state.
        """
        x_seq = jnp.reshape(x_seq, (-1, self.input_dim)).astype(jnp.float32)
        T = x_seq.shape[0]
        h, c = self._hidden
        y, h_new, c_new = self._get_fn(T)(
            x_seq, h, c, self.wih_t, self.whh_t, self.b,
            self.wfc_t_pad, self.bfc_pad)
        self._hidden = (h_new, c_new)
        return y.reshape(T, 1, self.output_dim)

    def __call__(self, x):
        # torch: x.view(1, 1, -1) -> a single timestep.
        y = self.forward_sequence(jnp.reshape(x, (1, self.input_dim)))
        return y.reshape(1, 1, self.output_dim)


if __name__ == "__main__":
    INPUT_DIM, HIDDEN, OUT_DIM, T = 16, 32, 8, 8

    key = jax.random.PRNGKey(0)
    pkey, xkey = jax.random.split(key)
    ctrl = LSTMControllerPallas(INPUT_DIM, HIDDEN, OUT_DIM, pkey)
    x_seq = jax.random.normal(xkey, (T, INPUT_DIM), jnp.float32)

    # Fused sequence forward (one pallas_call for all T steps).
    ys = ctrl.forward_sequence(x_seq)                 # (T, 1, OUT_DIM)
    h_fin, c_fin = ctrl._hidden
    jax.block_until_ready((ys, h_fin, c_fin))

    # Single-step path (torch's one-call-per-step interface).
    ctrl.reset()
    y_step0 = ctrl(x_seq[0])
    jax.block_until_ready(y_step0)

    # Pure-JAX reference: step one timestep at a time with the exact LSTM math.
    def ref_step(x, h, c):
        gates = x @ ctrl.wih_t + h @ ctrl.whh_t + ctrl.b
        Hh = HIDDEN
        i = jax.nn.sigmoid(gates[:, 0 * Hh:1 * Hh])
        f = jax.nn.sigmoid(gates[:, 1 * Hh:2 * Hh])
        g = jnp.tanh(gates[:, 2 * Hh:3 * Hh])
        o = jax.nn.sigmoid(gates[:, 3 * Hh:4 * Hh])
        c_new = f * c + i * g
        h_new = o * jnp.tanh(c_new)
        y = jnp.tanh(h_new @ ctrl.wfc_t + ctrl.bfc)
        return y, h_new, c_new

    h = jnp.zeros((1, HIDDEN), jnp.float32)
    c = jnp.zeros((1, HIDDEN), jnp.float32)
    ref_ys = []
    for t in range(T):
        y, h, c = ref_step(x_seq[t:t + 1], h, c)
        ref_ys.append(y)
    ref_ys = jnp.stack(ref_ys, axis=0)                # (T, 1, OUT_DIM)

    assert ys.shape == (T, 1, OUT_DIM)
    assert jnp.allclose(ys, ref_ys, atol=2e-5, rtol=2e-5)
    assert jnp.allclose(h_fin, h, atol=2e-5, rtol=2e-5)
    assert jnp.allclose(c_fin, c, atol=2e-5, rtol=2e-5)
    assert y_step0.shape == (1, 1, OUT_DIM)
    assert jnp.allclose(y_step0, ref_ys[0], atol=2e-5, rtol=2e-5)

    print("KERNEL_OK")
</pallas_src>

<mosaic_0001>
module attributes {stable_mosaic.version = 11 : i64} {
  func.func @_lstm_seq_kernel(%arg0: memref<8x16xf32, #tpu.memory_space<vmem>>, %arg1: memref<1x32xf32, #tpu.memory_space<vmem>>, %arg2: memref<1x32xf32, #tpu.memory_space<vmem>>, %arg3: memref<16x128xf32, #tpu.memory_space<vmem>>, %arg4: memref<32x128xf32, #tpu.memory_space<vmem>>, %arg5: memref<1x128xf32, #tpu.memory_space<vmem>>, %arg6: memref<32x128xf32, #tpu.memory_space<vmem>>, %arg7: memref<1x128xf32, #tpu.memory_space<vmem>>, %arg8: memref<8x128xf32, #tpu.memory_space<vmem>>, %arg9: memref<1x32xf32, #tpu.memory_space<vmem>>, %arg10: memref<1x32xf32, #tpu.memory_space<vmem>>, %arg11: memref<8x128xf32, #tpu.memory_space<vmem>>, %arg12: memref<8x32xf32, #tpu.memory_space<vmem>>) attributes {dimension_semantics = [], scalar_prefetch = 0 : i64, scratch_operands = 2 : i64, tpu.core_type = #tpu.core_type<tc>} {
    %c0 = arith.constant 0 : index
    %c0_0 = arith.constant 0 : index
    %0 = vector.load %arg0[%c0, %c0_0] : memref<8x16xf32, #tpu.memory_space<vmem>>, vector<8x16xf32>
    %c0_1 = arith.constant 0 : index
    %c0_2 = arith.constant 0 : index
    %1 = vector.load %arg3[%c0_1, %c0_2] : memref<16x128xf32, #tpu.memory_space<vmem>>, vector<16x128xf32>
    %cst = arith.constant dense<0.000000e+00> : vector<8x128xf32>
    %2 = tpu.matmul %0, %1, %cst {dimension_numbers = #tpu.dot_dimension_numbers<[1], [0], [0], [1], [0, 0, 1, 1], [], []>} : vector<8x16xf32>, vector<16x128xf32>, vector<8x128xf32> -> vector<8x128xf32>
    %c0_3 = arith.constant 0 : index
    %c0_4 = arith.constant 0 : index
    %3 = vector.load %arg5[%c0_3, %c0_4] : memref<1x128xf32, #tpu.memory_space<vmem>>, vector<1x128xf32>
    %4 = vector.broadcast %3 : vector<1x128xf32> to vector<8x128xf32>
    %5 = arith.addf %2, %4 : vector<8x128xf32>
    %c0_5 = arith.constant 0 : index
    %c0_6 = arith.constant 0 : index
    %6 = vector.load %arg11[%c0_5, %c0_6] : memref<8x128xf32, #tpu.memory_space<vmem>>, vector<8x128xf32>
    tpu.vector_store %arg11[%c0_5, %c0_6], %5 {strides = array<i32>} : memref<8x128xf32, #tpu.memory_space<vmem>>, vector<8x128xf32>,
    %7 = tpu.iota {dimensions = array<i32: 1>} : vector<1x128xi32>
    %c64_i32 = arith.constant 64 : i32
    %8 = vector.broadcast %c64_i32 : i32 to vector<1x128xi32>
    %9 = arith.cmpi sge, %7, %8 : vector<1x128xi32>
    %c96_i32 = arith.constant 96 : i32
    %10 = vector.broadcast %c96_i32 : i32 to vector<1x128xi32>
    %11 = arith.cmpi slt, %7, %10 : vector<1x128xi32>
    %12 = arith.andi %9, %11 : vector<1x128xi1>
    %cst_7 = arith.constant 1.000000e+00 : f32
    %cst_8 = arith.constant 5.000000e-01 : f32
    %13 = vector.broadcast %cst_7 : f32 to vector<1x128xf32>
    %14 = vector.broadcast %cst_8 : f32 to vector<1x128xf32>
    %15 = arith.select %12, %13, %14 : vector<1x128xi1>, vector<1x128xf32>
    %cst_9 = arith.constant 0.000000e+00 : f32
    %cst_10 = arith.constant 5.000000e-01 : f32
    %16 = vector.broadcast %cst_9 : f32 to vector<1x128xf32>
    %17 = vector.broadcast %cst_10 : f32 to vector<1x128xf32>
    %18 = arith.select %12, %16, %17 : vector<1x128xi1>, vector<1x128xf32>
    %c0_11 = arith.constant 0 : index
    %c0_12 = arith.constant 0 : index
    %19 = vector.load %arg4[%c0_11, %c0_12] : memref<32x128xf32, #tpu.memory_space<vmem>>, vector<32x128xf32>
    %c0_13 = arith.constant 0 : index
    %c0_14 = arith.constant 0 : index
    %20 = vector.load %arg1[%c0_13, %c0_14] : memref<1x32xf32, #tpu.memory_space<vmem>>, vector<1x32xf32>
    %c0_15 = arith.constant 0 : index
    %c0_16 = arith.constant 0 : index
    %21 = vector.load %arg2[%c0_15, %c0_16] : memref<1x32xf32, #tpu.memory_space<vmem>>, vector<1x32xf32>
    %c0_i32 = arith.constant 0 : i32
    %22 = arith.index_cast %c0_i32 : i32 to index
    %c0_17 = arith.constant 0 : index
    %23 = vector.load %arg11[%22, %c0_17] : memref<8x128xf32, #tpu.memory_space<vmem>>, vector<1x128xf32>
    %cst_18 = arith.constant dense<0.000000e+00> : vector<1x128xf32>
    %24 = tpu.matmul %20, %19, %cst_18 {dimension_numbers = #tpu.dot_dimension_numbers<[1], [0], [0], [1], [0, 0, 1, 1], [], []>} : vector<1x32xf32>, vector<32x128xf32>, vector<1x128xf32> -> vector<1x128xf32>
    %25 = arith.addf %23, %24 : vector<1x128xf32>
    %26 = arith.mulf %25, %15 : vector<1x128xf32>
    %27 = math.tanh %26 : vector<1x128xf32>
    %28 = arith.mulf %27, %15 : vector<1x128xf32>
    %29 = arith.addf %28, %18 : vector<1x128xf32>
    %30 = vector.extract_strided_slice %29 {offsets = [0, 0], sizes = [1, 32], strides = [1, 1]} : vector<1x128xf32> to vector<1x32xf32>
    %31 = vector.extract_strided_slice %29 {offsets = [0, 32], sizes = [1, 32], strides = [1, 1]} : vector<1x128xf32> to vector<1x32xf32>
    %32 = vector.extract_strided_slice %29 {offsets = [0, 64], sizes = [1, 32], strides = [1, 1]} : vector<1x128xf32> to vector<1x32xf32>
    %33 = vector.extract_strided_slice %29 {offsets = [0, 96], sizes = [1, 32], strides = [1, 1]} : vector<1x128xf32> to vector<1x32xf32>
    %34 = arith.mulf %31, %21 : vector<1x32xf32>
    %35 = arith.mulf %30, %32 : vector<1x32xf32>
    %36 = arith.addf %34, %35 : vector<1x32xf32>
    %37 = math.tanh %36 : vector<1x32xf32>
    %38 = arith.mulf %33, %37 : vector<1x32xf32>
    %39 = arith.index_cast %c0_i32 : i32 to index
    %c0_19 = arith.constant 0 : index
    %40 = vector.load %arg12[%39, %c0_19] : memref<8x32xf32, #tpu.memory_space<vmem>>, vector<1x32xf32>
    tpu.vector_store %arg12[%39, %c0_19], %38 {strides = array<i32>} : memref<8x32xf32, #tpu.memory_space<vmem>>, vector<1x32xf32>,
    %c1_i32 = arith.constant 1 : i32
    %41 = arith.index_cast %c1_i32 : i32 to index
    %c0_20 = arith.constant 0 : index
    %42 = vector.load %arg11[%41, %c0_20] : memref<8x128xf32, #tpu.memory_space<vmem>>, vector<1x128xf32>
    %cst_21 = arith.constant dense<0.000000e+00> : vector<1x128xf32>
    %43 = tpu.matmul %38, %19, %cst_21 {dimension_numbers = #tpu.dot_dimension_numbers<[1], [0], [0], [1], [0, 0, 1, 1], [], []>} : vector<1x32xf32>, vector<32x128xf32>, vector<1x128xf32> -> vector<1x128xf32>
    %44 = arith.addf %42, %43 : vector<1x128xf32>
    %45 = arith.mulf %44, %15 : vector<1x128xf32>
    %46 = math.tanh %45 : vector<1x128xf32>
    %47 = arith.mulf %46, %15 : vector<1x128xf32>
    %48 = arith.addf %47, %18 : vector<1x128xf32>
    %49 = vector.extract_strided_slice %48 {offsets = [0, 0], sizes = [1, 32], strides = [1, 1]} : vector<1x128xf32> to vector<1x32xf32>
    %50 = vector.extract_strided_slice %48 {offsets = [0, 32], sizes = [1, 32], strides = [1, 1]} : vector<1x128xf32> to vector<1x32xf32>
    %51 = vector.extract_strided_slice %48 {offsets = [0, 64], sizes = [1, 32], strides = [1, 1]} : vector<1x128xf32> to vector<1x32xf32>
    %52 = vector.extract_strided_slice %48 {offsets = [0, 96], sizes = [1, 32], strides = [1, 1]} : vector<1x128xf32> to vector<1x32xf32>
    %53 = arith.mulf %50, %36 : vector<1x32xf32>
    %54 = arith.mulf %49, %51 : vector<1x32xf32>
    %55 = arith.addf %53, %54 : vector<1x32xf32>
    %56 = math.tanh %55 : vector<1x32xf32>
    %57 = arith.mulf %52, %56 : vector<1x32xf32>
    %58 = arith.index_cast %c1_i32 : i32 to index
    %c0_22 = arith.constant 0 : index
    %59 = vector.load %arg12[%58, %c0_22] : memref<8x32xf32, #tpu.memory_space<vmem>>, vector<1x32xf32>
    tpu.vector_store %arg12[%58, %c0_22], %57 {strides = array<i32>} : memref<8x32xf32, #tpu.memory_space<vmem>>, vector<1x32xf32>,
    %c2_i32 = arith.constant 2 : i32
    %60 = arith.index_cast %c2_i32 : i32 to index
    %c0_23 = arith.constant 0 : index
    %61 = vector.load %arg11[%60, %c0_23] : memref<8x128xf32, #tpu.memory_space<vmem>>, vector<1x128xf32>
    %cst_24 = arith.constant dense<0.000000e+00> : vector<1x128xf32>
    %62 = tpu.matmul %57, %19, %cst_24 {dimension_numbers = #tpu.dot_dimension_numbers<[1], [0], [0], [1], [0, 0, 1, 1], [], []>} : vector<1x32xf32>, vector<32x128xf32>, vector<1x128xf32> -> vector<1x128xf32>
    %63 = arith.addf %61, %62 : vector<1x128xf32>
    %64 = arith.mulf %63, %15 : vector<1x128xf32>
    %65 = math.tanh %64 : vector<1x128xf32>
    %66 = arith.mulf %65, %15 : vector<1x128xf32>
    %67 = arith.addf %66, %18 : vector<1x128xf32>
    %68 = vector.extract_strided_slice %67 {offsets = [0, 0], sizes = [1, 32], strides = [1, 1]} : vector<1x128xf32> to vector<1x32xf32>
    %69 = vector.extract_strided_slice %67 {offsets = [0, 32], sizes = [1, 32], strides = [1, 1]} : vector<1x128xf32> to vector<1x32xf32>
    %70 = vector.extract_strided_slice %67 {offsets = [0, 64], sizes = [1, 32], strides = [1, 1]} : vector<1x128xf32> to vector<1x32xf32>
    %71 = vector.extract_strided_slice %67 {offsets = [0, 96], sizes = [1, 32], strides = [1, 1]} : vector<1x128xf32> to vector<1x32xf32>
    %72 = arith.mulf %69, %55 : vector<1x32xf32>
    %73 = arith.mulf %68, %70 : vector<1x32xf32>
    %74 = arith.addf %72, %73 : vector<1x32xf32>
    %75 = math.tanh %74 : vector<1x32xf32>
    %76 = arith.mulf %71, %75 : vector<1x32xf32>
    %77 = arith.index_cast %c2_i32 : i32 to index
    %c0_25 = arith.constant 0 : index
    %78 = vector.load %arg12[%77, %c0_25] : memref<8x32xf32, #tpu.memory_space<vmem>>, vector<1x32xf32>
    tpu.vector_store %arg12[%77, %c0_25], %76 {strides = array<i32>} : memref<8x32xf32, #tpu.memory_space<vmem>>, vector<1x32xf32>,
    %c3_i32 = arith.constant 3 : i32
    %79 = arith.index_cast %c3_i32 : i32 to index
    %c0_26 = arith.constant 0 : index
    %80 = vector.load %arg11[%79, %c0_26] : memref<8x128xf32, #tpu.memory_space<vmem>>, vector<1x128xf32>
    %cst_27 = arith.constant dense<0.000000e+00> : vector<1x128xf32>
    %81 = tpu.matmul %76, %19, %cst_27 {dimension_numbers = #tpu.dot_dimension_numbers<[1], [0], [0], [1], [0, 0, 1, 1], [], []>} : vector<1x32xf32>, vector<32x128xf32>, vector<1x128xf32> -> vector<1x128xf32>
    %82 = arith.addf %80, %81 : vector<1x128xf32>
    %83 = arith.mulf %82, %15 : vector<1x128xf32>
    %84 = math.tanh %83 : vector<1x128xf32>
    %85 = arith.mulf %84, %15 : vector<1x128xf32>
    %86 = arith.addf %85, %18 : vector<1x128xf32>
    %87 = vector.extract_strided_slice %86 {offsets = [0, 0], sizes = [1, 32], strides = [1, 1]} : vector<1x128xf32> to vector<1x32xf32>
    %88 = vector.extract_strided_slice %86 {offsets = [0, 32], sizes = [1, 32], strides = [1, 1]} : vector<1x128xf32> to vector<1x32xf32>
    %89 = vector.extract_strided_slice %86 {offsets = [0, 64], sizes = [1, 32], strides = [1, 1]} : vector<1x128xf32> to vector<1x32xf32>
    %90 = vector.extract_strided_slice %86 {offsets = [0, 96], sizes = [1, 32], strides = [1, 1]} : vector<1x128xf32> to vector<1x32xf32>
    %91 = arith.mulf %88, %74 : vector<1x32xf32>
    %92 = arith.mulf %87, %89 : vector<1x32xf32>
    %93 = arith.addf %91, %92 : vector<1x32xf32>
    %94 = math.tanh %93 : vector<1x32xf32>
    %95 = arith.mulf %90, %94 : vector<1x32xf32>
    %96 = arith.index_cast %c3_i32 : i32 to index
    %c0_28 = arith.constant 0 : index
    %97 = vector.load %arg12[%96, %c0_28] : memref<8x32xf32, #tpu.memory_space<vmem>>, vector<1x32xf32>
    tpu.vector_store %arg12[%96, %c0_28], %95 {strides = array<i32>} : memref<8x32xf32, #tpu.memory_space<vmem>>, vector<1x32xf32>,
    %c4_i32 = arith.constant 4 : i32
    %98 = arith.index_cast %c4_i32 : i32 to index
    %c0_29 = arith.constant 0 : index
    %99 = vector.load %arg11[%98, %c0_29] : memref<8x128xf32, #tpu.memory_space<vmem>>, vector<1x128xf32>
    %cst_30 = arith.constant dense<0.000000e+00> : vector<1x128xf32>
    %100 = tpu.matmul %95, %19, %cst_30 {dimension_numbers = #tpu.dot_dimension_numbers<[1], [0], [0], [1], [0, 0, 1, 1], [], []>} : vector<1x32xf32>, vector<32x128xf32>, vector<1x128xf32> -> vector<1x128xf32>
    %101 = arith.addf %99, %100 : vector<1x128xf32>
    %102 = arith.mulf %101, %15 : vector<1x128xf32>
    %103 = math.tanh %102 : vector<1x128xf32>
    %104 = arith.mulf %103, %15 : vector<1x128xf32>
    %105 = arith.addf %104, %18 : vector<1x128xf32>
    %106 = vector.extract_strided_slice %105 {offsets = [0, 0], sizes = [1, 32], strides = [1, 1]} : vector<1x128xf32> to vector<1x32xf32>
    %107 = vector.extract_strided_slice %105 {offsets = [0, 32], sizes = [1, 32], strides = [1, 1]} : vector<1x128xf32> to vector<1x32xf32>
    %108 = vector.extract_strided_slice %105 {offsets = [0, 64], sizes = [1, 32], strides = [1, 1]} : vector<1x128xf32> to vector<1x32xf32>
    %109 = vector.extract_strided_slice %105 {offsets = [0, 96], sizes = [1, 32], strides = [1, 1]} : vector<1x128xf32> to vector<1x32xf32>
    %110 = arith.mulf %107, %93 : vector<1x32xf32>
    %111 = arith.mulf %106, %108 : vector<1x32xf32>
    %112 = arith.addf %110, %111 : vector<1x32xf32>
    %113 = math.tanh %112 : vector<1x32xf32>
    %114 = arith.mulf %109, %113 : vector<1x32xf32>
    %115 = arith.index_cast %c4_i32 : i32 to index
    %c0_31 = arith.constant 0 : index
    %116 = vector.load %arg12[%115, %c0_31] : memref<8x32xf32, #tpu.memory_space<vmem>>, vector<1x32xf32>
    tpu.vector_store %arg12[%115, %c0_31], %114 {strides = array<i32>} : memref<8x32xf32, #tpu.memory_space<vmem>>, vector<1x32xf32>,
    %c5_i32 = arith.constant 5 : i32
    %117 = arith.index_cast %c5_i32 : i32 to index
    %c0_32 = arith.constant 0 : index
    %118 = vector.load %arg11[%117, %c0_32] : memref<8x128xf32, #tpu.memory_space<vmem>>, vector<1x128xf32>
    %cst_33 = arith.constant dense<0.000000e+00> : vector<1x128xf32>
    %119 = tpu.matmul %114, %19, %cst_33 {dimension_numbers = #tpu.dot_dimension_numbers<[1], [0], [0], [1], [0, 0, 1, 1], [], []>} : vector<1x32xf32>, vector<32x128xf32>, vector<1x128xf32> -> vector<1x128xf32>
    %120 = arith.addf %118, %119 : vector<1x128xf32>
    %121 = arith.mulf %120, %15 : vector<1x128xf32>
    %122 = math.tanh %121 : vector<1x128xf32>
    %123 = arith.mulf %122, %15 : vector<1x128xf32>
    %124 = arith.addf %123, %18 : vector<1x128xf32>
    %125 = vector.extract_strided_slice %124 {offsets = [0, 0], sizes = [1, 32], strides = [1, 1]} : vector<1x128xf32> to vector<1x32xf32>
    %126 = vector.extract_strided_slice %124 {offsets = [0, 32], sizes = [1, 32], strides = [1, 1]} : vector<1x128xf32> to vector<1x32xf32>
    %127 = vector.extract_strided_slice %124 {offsets = [0, 64], sizes = [1, 32], strides = [1, 1]} : vector<1x128xf32> to vector<1x32xf32>
    %128 = vector.extract_strided_slice %124 {offsets = [0, 96], sizes = [1, 32], strides = [1, 1]} : vector<1x128xf32> to vector<1x32xf32>
    %129 = arith.mulf %126, %112 : vector<1x32xf32>
    %130 = arith.mulf %125, %127 : vector<1x32xf32>
    %131 = arith.addf %129, %130 : vector<1x32xf32>
    %132 = math.tanh %131 : vector<1x32xf32>
    %133 = arith.mulf %128, %132 : vector<1x32xf32>
    %134 = arith.index_cast %c5_i32 : i32 to index
    %c0_34 = arith.constant 0 : index
    %135 = vector.load %arg12[%134, %c0_34] : memref<8x32xf32, #tpu.memory_space<vmem>>, vector<1x32xf32>
    tpu.vector_store %arg12[%134, %c0_34], %133 {strides = array<i32>} : memref<8x32xf32, #tpu.memory_space<vmem>>, vector<1x32xf32>,
    %c6_i32 = arith.constant 6 : i32
    %136 = arith.index_cast %c6_i32 : i32 to index
    %c0_35 = arith.constant 0 : index
    %137 = vector.load %arg11[%136, %c0_35] : memref<8x128xf32, #tpu.memory_space<vmem>>, vector<1x128xf32>
    %cst_36 = arith.constant dense<0.000000e+00> : vector<1x128xf32>
    %138 = tpu.matmul %133, %19, %cst_36 {dimension_numbers = #tpu.dot_dimension_numbers<[1], [0], [0], [1], [0, 0, 1, 1], [], []>} : vector<1x32xf32>, vector<32x128xf32>, vector<1x128xf32> -> vector<1x128xf32>
    %139 = arith.addf %137, %138 : vector<1x128xf32>
    %140 = arith.mulf %139, %15 : vector<1x128xf32>
    %141 = math.tanh %140 : vector<1x128xf32>
    %142 = arith.mulf %141, %15 : vector<1x128xf32>
    %143 = arith.addf %142, %18 : vector<1x128xf32>
    %144 = vector.extract_strided_slice %143 {offsets = [0, 0], sizes = [1, 32], strides = [1, 1]} : vector<1x128xf32> to vector<1x32xf32>
    %145 = vector.extract_strided_slice %143 {offsets = [0, 32], sizes = [1, 32], strides = [1, 1]} : vector<1x128xf32> to vector<1x32xf32>
    %146 = vector.extract_strided_slice %143 {offsets = [0, 64], sizes = [1, 32], strides = [1, 1]} : vector<1x128xf32> to vector<1x32xf32>
    %147 = vector.extract_strided_slice %143 {offsets = [0, 96], sizes = [1, 32], strides = [1, 1]} : vector<1x128xf32> to vector<1x32xf32>
    %148 = arith.mulf %145, %131 : vector<1x32xf32>
    %149 = arith.mulf %144, %146 : vector<1x32xf32>
    %150 = arith.addf %148, %149 : vector<1x32xf32>
    %151 = math.tanh %150 : vector<1x32xf32>
    %152 = arith.mulf %147, %151 : vector<1x32xf32>
    %153 = arith.index_cast %c6_i32 : i32 to index
    %c0_37 = arith.constant 0 : index
    %154 = vector.load %arg12[%153, %c0_37] : memref<8x32xf32, #tpu.memory_space<vmem>>, vector<1x32xf32>
    tpu.vector_store %arg12[%153, %c0_37], %152 {strides = array<i32>} : memref<8x32xf32, #tpu.memory_space<vmem>>, vector<1x32xf32>,
    %c7_i32 = arith.constant 7 : i32
    %155 = arith.index_cast %c7_i32 : i32 to index
    %c0_38 = arith.constant 0 : index
    %156 = vector.load %arg11[%155, %c0_38] : memref<8x128xf32, #tpu.memory_space<vmem>>, vector<1x128xf32>
    %cst_39 = arith.constant dense<0.000000e+00> : vector<1x128xf32>
    %157 = tpu.matmul %152, %19, %cst_39 {dimension_numbers = #tpu.dot_dimension_numbers<[1], [0], [0], [1], [0, 0, 1, 1], [], []>} : vector<1x32xf32>, vector<32x128xf32>, vector<1x128xf32> -> vector<1x128xf32>
    %158 = arith.addf %156, %157 : vector<1x128xf32>
    %159 = arith.mulf %158, %15 : vector<1x128xf32>
    %160 = math.tanh %159 : vector<1x128xf32>
    %161 = arith.mulf %160, %15 : vector<1x128xf32>
    %162 = arith.addf %161, %18 : vector<1x128xf32>
    %163 = vector.extract_strided_slice %162 {offsets = [0, 0], sizes = [1, 32], strides = [1, 1]} : vector<1x128xf32> to vector<1x32xf32>
    %164 = vector.extract_strided_slice %162 {offsets = [0, 32], sizes = [1, 32], strides = [1, 1]} : vector<1x128xf32> to vector<1x32xf32>
    %165 = vector.extract_strided_slice %162 {offsets = [0, 64], sizes = [1, 32], strides = [1, 1]} : vector<1x128xf32> to vector<1x32xf32>
    %166 = vector.extract_strided_slice %162 {offsets = [0, 96], sizes = [1, 32], strides = [1, 1]} : vector<1x128xf32> to vector<1x32xf32>
    %167 = arith.mulf %164, %150 : vector<1x32xf32>
    %168 = arith.mulf %163, %165 : vector<1x32xf32>
    %169 = arith.addf %167, %168 : vector<1x32xf32>
    %170 = math.tanh %169 : vector<1x32xf32>
    %171 = arith.mulf %166, %170 : vector<1x32xf32>
    %172 = arith.index_cast %c7_i32 : i32 to index
    %c0_40 = arith.constant 0 : index
    %173 = vector.load %arg12[%172, %c0_40] : memref<8x32xf32, #tpu.memory_space<vmem>>, vector<1x32xf32>
    tpu.vector_store %arg12[%172, %c0_40], %171 {strides = array<i32>} : memref<8x32xf32, #tpu.memory_space<vmem>>, vector<1x32xf32>,
    %c8_i32 = arith.constant 8 : i32
    %c0_41 = arith.constant 0 : index
    %c0_42 = arith.constant 0 : index
    %174 = vector.load %arg9[%c0_41, %c0_42] : memref<1x32xf32, #tpu.memory_space<vmem>>, vector<1x32xf32>
    tpu.vector_store %arg9[%c0_41, %c0_42], %171 {strides = array<i32>} : memref<1x32xf32, #tpu.memory_space<vmem>>, vector<1x32xf32>,
    %c0_43 = arith.constant 0 : index
    %c0_44 = arith.constant 0 : index
    %175 = vector.load %arg10[%c0_43, %c0_44] : memref<1x32xf32, #tpu.memory_space<vmem>>, vector<1x32xf32>
    tpu.vector_store %arg10[%c0_43, %c0_44], %169 {strides = array<i32>} : memref<1x32xf32, #tpu.memory_space<vmem>>, vector<1x32xf32>,
    %c0_45 = arith.constant 0 : index
    %c0_46 = arith.constant 0 : index
    %176 = vector.load %arg12[%c0_45, %c0_46] : memref<8x32xf32, #tpu.memory_space<vmem>>, vector<8x32xf32>
    %c0_47 = arith.constant 0 : index
    %c0_48 = arith.constant 0 : index
    %177 = vector.load %arg6[%c0_47, %c0_48] : memref<32x128xf32, #tpu.memory_space<vmem>>, vector<32x128xf32>
    %cst_49 = arith.constant dense<0.000000e+00> : vector<8x128xf32>
    %178 = tpu.matmul %176, %177, %cst_49 {dimension_numbers = #tpu.dot_dimension_numbers<[1], [0], [0], [1], [0, 0, 1, 1], [], []>} : vector<8x32xf32>, vector<32x128xf32>, vector<8x128xf32> -> vector<8x128xf32>
    %c0_50 = arith.constant 0 : index
    %c0_51 = arith.constant 0 : index
    %179 = vector.load %arg7[%c0_50, %c0_51] : memref<1x128xf32, #tpu.memory_space<vmem>>, vector<1x128xf32>
    %180 = vector.broadcast %179 : vector<1x128xf32> to vector<8x128xf32>
    %181 = arith.addf %178, %180 : vector<8x128xf32>
    %182 = math.tanh %181 : vector<8x128xf32>
    %c0_52 = arith.constant 0 : index
    %c0_53 = arith.constant 0 : index
    %183 = vector.load %arg8[%c0_52, %c0_53] : memref<8x128xf32, #tpu.memory_space<vmem>>, vector<8x128xf32>
    tpu.vector_store %arg8[%c0_52, %c0_53], %182 {strides = array<i32>} : memref<8x128xf32, #tpu.memory_space<vmem>>, vector<8x128xf32>,
    return
  }
}

</mosaic_0001>

<llo_original>
// kernel: run.1
$region0: #{run.1}
  #allocation0 [shape = 'u32[]', space=smem, size = 0x4, offset = 0x4, fixed_abs, tag = 'smem constant byte address 0x4 - core index']
  #allocation1 [shape = 'u32[144,128]{1,0:T(1,128)}', space=vmem, size = 0x12000, scoped, tag = 'internal scratch']
  #allocation2 [shape = 'f32[8,128]{1,0:T(8,128)}', space=vmem, size = 0x1000, scoped, tag = 'scratch operand']
  #allocation3 [shape = 'f32[8,32]{1,0:T(8,128)}', space=vmem, size = 0x1000, scoped, tag = 'scratch operand']
  %s0 = inlined_call_operand.vmem [shape: f32[8,16], index: 0, kind: input, shape index: {}]
  %s1 = inlined_call_operand.vmem [shape: f32[1,32], index: 1, kind: input, shape index: {}, may-alias: {1,9}]
  %s2 = inlined_call_operand.vmem [shape: f32[1,32], index: 2, kind: input, shape index: {}, may-alias: {2,10}]
  %s3 = inlined_call_operand.vmem [shape: f32[16,128], index: 3, kind: input, shape index: {}]
  %s4 = inlined_call_operand.hbm [shape: f32[32,128], index: 4, kind: input, shape index: {}]
  %s5 = inlined_call_operand.vmem [shape: f32[1,128], index: 5, kind: input, shape index: {}]
  %s6 = inlined_call_operand.hbm [shape: f32[32,128], index: 6, kind: input, shape index: {}]
  %s7 = inlined_call_operand.vmem [shape: f32[1,128], index: 7, kind: input, shape index: {}]
  %s8 = inlined_call_operand.hbm [shape: f32[8,128], index: 8, kind: output, shape index: {0}]
  %s9 = inlined_call_operand.vmem [shape: f32[1,32], index: 9, kind: output, shape index: {1}, may-alias: {1,9}]
  %s10 = inlined_call_operand.vmem [shape: f32[1,32], index: 10, kind: output, shape index: {2}, may-alias: {2,10}]
  %11 = xla_tuple %s8, %s9, %s10
  %s12 = sld [smem:[#allocation0]]
  $region66: #{run.1} parent=0
    _
  %s14 = ssub.s32 1, %s12
  %s15 = scalar_select 0, %s14, %s12
  $region1: #{run.1} parent=0
    #allocation4 [shape = 'u8[16384]{0}', space=vmem, size = 0x4000, scoped, tag = 'input window, operand 4, single buffered']
    #allocation5 [shape = 's32[1]{0}', space=sflag, size = 0x4, scoped, tag = 'scoped memory for run.1']
    #allocation6 [shape = 's32[1]{0}', space=sflag, size = 0x4, scoped, tag = 'scoped memory for run.1']
    #allocation7 [shape = 'u8[16384]{0}', space=vmem, size = 0x4000, scoped, tag = 'input window, operand 6, single buffered']
    #allocation8 [shape = 's32[1]{0}', space=sflag, size = 0x4, scoped, tag = 'scoped memory for run.1']
    #allocation9 [shape = 'u8[4096]{0}', space=vmem, size = 0x1000, scoped, tag = 'output window, operand 0, single buffered']
    %16 = vsyncpa [#allocation5], 0
    %17 = vsyncpa [#allocation8], 0
    %18 = vsyncpa [#allocation6], 0
    // Predicated region
    $region2: #{run.1} parent=1 // pred_check
      _
    $region3: #{run.1} parent=1 // pred_check_branch
      %20 = sbr.rel (0) target = $region5
    $region4: #{run.1} parent=1 // pred_region
      _
    $region5: #{run.1} parent=1 // pred_fallthru
      _
    // Predicated region
    $region6: #{run.1} parent=1 // pred_check
      _
    $region7: #{run.1} parent=1 // pred_check_branch
      %22 = sbr.rel (0) target = $region9
    $region8: #{run.1} parent=1 // pred_region
      _
    $region9: #{run.1} parent=1 // pred_fallthru
      _
    // Predicated region
    $region10: #{run.1} parent=1 // pred_check
      _
    $region11: #{run.1} parent=1 // pred_check_branch
      %24 = sbr.rel (0) target = $region13
    $region12: #{run.1} parent=1 // pred_region
      _
    $region13: #{run.1} parent=1 // pred_fallthru
      _
    // Predicated region
    $region14: #{run.1} parent=1 // pred_check
      _
    $region15: #{run.1} parent=1 // pred_check_branch
      %26 = sbr.rel (0) target = $region17
    $region16: #{run.1} parent=1 // pred_region
      _
    $region17: #{run.1} parent=1 // pred_fallthru
      _
    // Predicated region
    $region18: #{run.1} parent=1 // pred_check
      _
    $region19: #{run.1} parent=1 // pred_check_branch
      %28 = sbr.rel (0) target = $region21
    $region20: #{run.1} parent=1 // pred_region
      %s30 = ssub.s32 512, 512
      %31 = vsyncadd [#allocation5], %s30
      %s32 = sshll.u32 [#allocation4], 4
      %s33 = int_to_ptr.vmem [resolvable:$true] %s32
      %38 = dma.hbm_to_vmem [thread:$0]  %s4, 512, %s33, [#allocation5], 128, 128, 8
    $region21: #{run.1} parent=1 // pred_fallthru
      _
    // Predicated region
    $region22: #{run.1} parent=1 // pred_check
      _
    $region23: #{run.1} parent=1 // pred_check_branch
      %40 = sbr.rel (0) target = $region25
    $region24: #{run.1} parent=1 // pred_region
      _
    $region25: #{run.1} parent=1 // pred_fallthru
      _
    // Predicated region
    $region26: #{run.1} parent=1 // pred_check
      _
    $region27: #{run.1} parent=1 // pred_check_branch
      %42 = sbr.rel (0) target = $region29
    $region28: #{run.1} parent=1 // pred_region
      %s44 = ssub.s32 512, 512
      %45 = vsyncadd [#allocation8], %s44
      %s46 = sshll.u32 [#allocation7], 4
      %s47 = int_to_ptr.vmem [resolvable:$true] %s46
      %52 = dma.hbm_to_vmem [thread:$0]  %s6, 512, %s47, [#allocation8], 128, 128, 8
    $region29: #{run.1} parent=1 // pred_fallthru
      _
    // Predicated region
    $region30: #{run.1} parent=1 // pred_check
      _
    $region31: #{run.1} parent=1 // pred_check_branch
      %54 = sbr.rel (0) target = $region33
    $region32: #{run.1} parent=1 // pred_region
      _
    $region33: #{run.1} parent=1 // pred_fallthru
      _
    // Predicated region
    $region34: #{run.1} parent=1 // pred_check
      _
    $region35: #{run.1} parent=1 // pred_check_branch
      %56 = sbr.rel (0) target = $region37
    $region36: #{run.1} parent=1 // pred_region
      %57 = dma.done [#allocation5], 512
    $region37: #{run.1} parent=1 // pred_fallthru
      _
    // Predicated region
    $region38: #{run.1} parent=1 // pred_check
      _
    $region39: #{run.1} parent=1 // pred_check_branch
      %59 = sbr.rel (0) target = $region41
    $region40: #{run.1} parent=1 // pred_region
      %60 = dma.done [#allocation8], 512
    $region41: #{run.1} parent=1 // pred_fallthru
      _
    %v61 = vld [vmem:[%s0] sm:$0xff]
    %v62 = vld [vmem:[%s3] sm:$0xff]
    %v63 = vld [vmem:[%s3 + $0x8] sm:$0xff]
    %v64 = vld [vmem:[%s5] sm:$0x1]
    %v66 = vlaneseq
    %v67 = vshrl.u32 %v66, 7
    %v68 = vsub.s32 0, %v67
    %v69 = vrot.slane %v64, %v68
    %vm71 = vcmask 130048
    %v73 = vsel %vm71, %v61, 0
    %75 = vmatprep.subr.mxu0 0.0
    %76 = vmatpush1.msra.mxu0 %v62
    %77 = vmatprep.subr.mxu0 0.0
    %78 = vmatpush1.msra.mxu0 %v63
    %79 = vmatprep.subr.mxu0 0.0
    %80 = vmatpush1.msra.mxu0 0.0
    %81 = vmatprep.subr.mxu0 0.0
    %82 = vmatpush1.msra.mxu0 0.0
    %83 = vmatprep.subr.mxu0 0.0
    %84 = vmatpush1.msra.mxu0 0.0
    %85 = vmatprep.subr.mxu0 0.0
    %86 = vmatpush1.msra.mxu0 0.0
    %87 = vmatprep.subr.mxu0 0.0
    %88 = vmatpush1.msra.mxu0 0.0
    %89 = vmatprep.subr.mxu0 0.0
    %90 = vmatpush1.msra.mxu0 0.0
    %91 = vmatprep.subr.mxu0 0.0
    %92 = vmatpush1.msra.mxu0 0.0
    %93 = vmatprep.subr.mxu0 0.0
    %94 = vmatpush1.msra.mxu0 0.0
    %95 = vmatprep.subr.mxu0 0.0
    %96 = vmatpush1.msra.mxu0 0.0
    %97 = vmatprep.subr.mxu0 0.0
    %98 = vmatpush1.msra.mxu0 0.0
    %99 = vmatprep.subr.mxu0 0.0
    %100 = vmatpush1.msra.mxu0 0.0
    %101 = vmatprep.subr.mxu0 0.0
    %102 = vmatpush1.msra.mxu0 0.0
    %103 = vmatprep.subr.mxu0 0.0
    %104 = vmatpush1.msra.mxu0 0.0
    %105 = vmatprep.subr.mxu0 0.0
    %106 = vmatpush1.msra.mxu0 0.0
    %107 = vmatprep.subr.mxu0 0.0
    %108 = vmatpush1.msra.mxu0 0.0
    %109 = vmatprep.subr.mxu0 0.0
    %110 = vmatpush1.msra.mxu0 0.0
    %111 = vmatprep.subr.mxu0 0.0
    %112 = vmatpush1.msra.mxu0 0.0
    %113 = vmatprep.subr.mxu0 0.0
    %114 = vmatpush1.msra.mxu0 0.0
    %115 = vmatprep.subr.mxu0 0.0
    %116 = vmatpush1.msra.mxu0 0.0
    %117 = vmatprep.subr.mxu0 0.0
    %118 = vmatpush1.msra.mxu0 0.0
    %119 = vmatprep.subr.mxu0 0.0
    %120 = vmatpush1.msra.mxu0 0.0
    %121 = vmatprep.subr.mxu0 0.0
    %122 = vmatpush1.msra.mxu0 0.0
    %123 = vmatprep.subr.mxu0 0.0
    %124 = vmatpush1.msra.mxu0 0.0
    %125 = vmatprep.subr.mxu0 0.0
    %126 = vmatpush1.msra.mxu0 0.0
    %127 = vmatprep.subr.mxu0 0.0
    %128 = vmatpush1.msra.mxu0 0.0
    %129 = vmatprep.subr.mxu0 0.0
    %130 = vmatpush1.msra.mxu0 0.0
    %131 = vmatprep.subr.mxu0 0.0
    %132 = vmatpush1.msra.mxu0 0.0
    %133 = vmatprep.subr.mxu0 0.0
    %134 = vmatpush1.msra.mxu0 0.0
    %135 = vmatprep.subr.mxu0 0.0
    %136 = vmatpush1.msra.mxu0 0.0
    %137 = vmatprep.subr.mxu0 0.0
    %138 = vmatpush1.msra.mxu0 0.0
    %139 = vmatprep.mubr.f32.mxu0 0.0
    %140 = vmatmul.mubr.f32.gmra.mrb[0].mxu0 %v73
    %v141 = vpop.f32.mrb[0].mxu0
    %v142 = vadd.f32 %v69, %v141
    %v143 = vpop.f32.mrb[0].mxu0
    %144 = vdwg.mxu0
    %145 = vst [vmem:[#allocation2] sm:$0xff] %v142
    %v146 = vlaneseq
    %v147 = vand.u32 %v146, 127
    %vm148 = vcmp.ge.s32.totalorder %v147, 64
    %vm149 = vcmp.lt.s32.totalorder %v147, 96
    %vm150 = vmand %vm148, %vm149
    %v151 = vsel %vm150, 1.0, 0.5
    %v152 = vsel %vm150, 0.0, 0.5
    %v153 = vld [vmem:[#allocation4] sm:$0xff]
    %v154 = vld [vmem:[#allocation4 + $0x8] sm:$0xff]
    %v155 = vld [vmem:[#allocation4 + $0x10] sm:$0xff]
    %v156 = vld [vmem:[#allocation4 + $0x18] sm:$0xff]
    %v157 = vld [vmem:[%s1] sm:$0x1]
    %v158 = vld [vmem:[%s2] sm:$0x1]
    %v159 = vld [vmem:[#allocation2] sm:$0x1]
    %vm160 = vcmask 261120
    %v162 = vsel %vm160, %v157, 0
    %164 = vmatprep.subr.mxu0 0.0
    %165 = vmatpush1.msra.mxu0 %v153
    %166 = vmatprep.subr.mxu0 0.0
    %167 = vmatpush1.msra.mxu0 %v154
    %168 = vmatprep.subr.mxu0 0.0
    %169 = vmatpush1.msra.mxu0 %v155
    %170 = vmatprep.subr.mxu0 0.0
    %171 = vmatpush1.msra.mxu0 %v156
    %172 = vmatprep.subr.mxu0 0.0
    %173 = vmatpush1.msra.mxu0 0.0
    %174 = vmatprep.subr.mxu0 0.0
    %175 = vmatpush1.msra.mxu0 0.0
    %176 = vmatprep.subr.mxu0 0.0
    %177 = vmatpush1.msra.mxu0 0.0
    %178 = vmatprep.subr.mxu0 0.0
    %179 = vmatpush1.msra.mxu0 0.0
    %180 = vmatprep.subr.mxu0 0.0
    %181 = vmatpush1.msra.mxu0 0.0
    %182 = vmatprep.subr.mxu0 0.0
    %183 = vmatpush1.msra.mxu0 0.0
    %184 = vmatprep.subr.mxu0 0.0
    %185 = vmatpush1.msra.mxu0 0.0
    %186 = vmatprep.subr.mxu0 0.0
    %187 = vmatpush1.msra.mxu0 0.0
    %188 = vmatprep.subr.mxu0 0.0
    %189 = vmatpush1.msra.mxu0 0.0
    %190 = vmatprep.subr.mxu0 0.0
    %191 = vmatpush1.msra.mxu0 0.0
    %192 = vmatprep.subr.mxu0 0.0
    %193 = vmatpush1.msra.mxu0 0.0
    %194 = vmatprep.subr.mxu0 0.0
    %195 = vmatpush1.msra.mxu0 0.0
    %196 = vmatprep.subr.mxu0 0.0
    %197 = vmatpush1.msra.mxu0 0.0
    %198 = vmatprep.subr.mxu0 0.0
    %199 = vmatpush1.msra.mxu0 0.0
    %200 = vmatprep.subr.mxu0 0.0
    %201 = vmatpush1.msra.mxu0 0.0
    %202 = vmatprep.subr.mxu0 0.0
    %203 = vmatpush1.msra.mxu0 0.0
    %204 = vmatprep.subr.mxu0 0.0
    %205 = vmatpush1.msra.mxu0 0.0
    %206 = vmatprep.subr.mxu0 0.0
    %207 = vmatpush1.msra.mxu0 0.0
    %208 = vmatprep.subr.mxu0 0.0
    %209 = vmatpush1.msra.mxu0 0.0
    %210 = vmatprep.subr.mxu0 0.0
    %211 = vmatpush1.msra.mxu0 0.0
    %212 = vmatprep.subr.mxu0 0.0
    %213 = vmatpush1.msra.mxu0 0.0
    %214 = vmatprep.subr.mxu0 0.0
    %215 = vmatpush1.msra.mxu0 0.0
    %216 = vmatprep.subr.mxu0 0.0
    %217 = vmatpush1.msra.mxu0 0.0
    %218 = vmatprep.subr.mxu0 0.0
    %219 = vmatpush1.msra.mxu0 0.0
    %220 = vmatprep.subr.mxu0 0.0
    %221 = vmatpush1.msra.mxu0 0.0
    %222 = vmatprep.subr.mxu0 0.0
    %223 = vmatpush1.msra.mxu0 0.0
    %224 = vmatprep.subr.mxu0 0.0
    %225 = vmatpush1.msra.mxu0 0.0
    %226 = vmatprep.subr.mxu0 0.0
    %227 = vmatpush1.msra.mxu0 0.0
    %228 = vmatprep.mubr.f32.mxu0 0.0
    %229 = vmatmul.mubr.f32.gmra.mrb[0].mxu0 %v162
    %v230 = vpop.f32.mrb[0].mxu0
    %v231 = vadd.f32 0.0, %v230
    %v232 = vpop.f32.mrb[0].mxu0
    %233 = vdwg.mxu0
    %v234 = vadd.f32 %v159, %v231
    %v235 = vmul.f32 %v234, %v151
    %v236 = vtanh.pop %v235
    %v237 = vmul.f32 %v236, %v151
    %v238 = vadd.f32 %v237, %v152
    %v240 = vlaneseq
    %v241 = vshrl.u32 %v240, 7
    %v242 = vsub.s32 0, %v241
    %v243 = vrot.slane %v158, %v242
    %244 = vrot.lane.b32.xlu0 %v243, 32
    %v245 = vpop.permute.xlu0 %244
    %v247 = vmul.f32 %v238, %v245
    %249 = vrot.lane.b32.xlu0 %v238, 64
    %v250 = vpop.permute.xlu0 %249
    %v252 = vmul.f32 %v238, %v250
    %254 = vrot.lane.b32.xlu0 %v252, 32
    %v255 = vpop.permute.xlu0 %254
    %v257 = vadd.f32 %v247, %v255
    %v258 = vtanh.pop %v257
    %260 = vrot.lane.b32.xlu0 %v258, 64
    %v261 = vpop.permute.xlu0 %260
    %v263 = vmul.f32 %v238, %v261
    %265 = vrot.lane.b32.xlu0 %v263, 32
    %v266 = vpop.permute.xlu0 %265
    %vm268 = vcmask 253952
    %269 = vst.msk [vmem:[#allocation3] sm:$0x1] %vm268, %v266
    %v270 = vld [vmem:[#allocation2 + $0x1] sm:$0x1]
    %v271 = vsel %vm160, %v266, 0
    %273 = vmatprep.subr.mxu0 0.0
    %274 = vmatpush1.msra.mxu0 %v153
    %275 = vmatprep.subr.mxu0 0.0
    %276 = vmatpush1.msra.mxu0 %v154
    %277 = vmatprep.subr.mxu0 0.0
    %278 = vmatpush1.msra.mxu0 %v155
    %279 = vmatprep.subr.mxu0 0.0
    %280 = vmatpush1.msra.mxu0 %v156
    %281 = vmatprep.subr.mxu0 0.0
    %282 = vmatpush1.msra.mxu0 0.0
    %283 = vmatprep.subr.mxu0 0.0
    %284 = vmatpush1.msra.mxu0 0.0
    %285 = vmatprep.subr.mxu0 0.0
    %286 = vmatpush1.msra.mxu0 0.0
    %287 = vmatprep.subr.mxu0 0.0
    %288 = vmatpush1.msra.mxu0 0.0
    %289 = vmatprep.subr.mxu0 0.0
    %290 = vmatpush1.msra.mxu0 0.0
    %291 = vmatprep.subr.mxu0 0.0
    %292 = vmatpush1.msra.mxu0 0.0
    %293 = vmatprep.subr.mxu0 0.0
    %294 = vmatpush1.msra.mxu0 0.0
    %295 = vmatprep.subr.mxu0 0.0
    %296 = vmatpush1.msra.mxu0 0.0
    %297 = vmatprep.subr.mxu0 0.0
    %298 = vmatpush1.msra.mxu0 0.0
    %299 = vmatprep.subr.mxu0 0.0
    %300 = vmatpush1.msra.mxu0 0.0
    %301 = vmatprep.subr.mxu0 0.0
    %302 = vmatpush1.msra.mxu0 0.0
    %303 = vmatprep.subr.mxu0 0.0
    %304 = vmatpush1.msra.mxu0 0.0
    %305 = vmatprep.subr.mxu0 0.0
    %306 = vmatpush1.msra.mxu0 0.0
    %307 = vmatprep.subr.mxu0 0.0
    %308 = vmatpush1.msra.mxu0 0.0
    %309 = vmatprep.subr.mxu0 0.0
    %310 = vmatpush1.msra.mxu0 0.0
    %311 = vmatprep.subr.mxu0 0.0
    %312 = vmatpush1.msra.mxu0 0.0
    %313 = vmatprep.subr.mxu0 0.0
    %314 = vmatpush1.msra.mxu0 0.0
    %315 = vmatprep.subr.mxu0 0.0
    %316 = vmatpush1.msra.mxu0 0.0
    %317 = vmatprep.subr.mxu0 0.0
    %318 = vmatpush1.msra.mxu0 0.0
    %319 = vmatprep.subr.mxu0 0.0
    %320 = vmatpush1.msra.mxu0 0.0
    %321 = vmatprep.subr.mxu0 0.0
    %322 = vmatpush1.msra.mxu0 0.0
    %323 = vmatprep.subr.mxu0 0.0
    %324 = vmatpush1.msra.mxu0 0.0
    %325 = vmatprep.subr.mxu0 0.0
    %326 = vmatpush1.msra.mxu0 0.0
    %327 = vmatprep.subr.mxu0 0.0
    %328 = vmatpush1.msra.mxu0 0.0
    %329 = vmatprep.subr.mxu0 0.0
    %330 = vmatpush1.msra.mxu0 0.0
    %331 = vmatprep.subr.mxu0 0.0
    %332 = vmatpush1.msra.mxu0 0.0
    %333 = vmatprep.subr.mxu0 0.0
    %334 = vmatpush1.msra.mxu0 0.0
    %335 = vmatprep.subr.mxu0 0.0
    %336 = vmatpush1.msra.mxu0 0.0
    %337 = vmatprep.mubr.f32.mxu0 0.0
    %338 = vmatmul.mubr.f32.gmra.mrb[0].mxu0 %v271
    %v339 = vpop.f32.mrb[0].mxu0
    %v340 = vadd.f32 0.0, %v339
    %v341 = vpop.f32.mrb[0].mxu0
    %342 = vdwg.mxu0
    %v343 = vadd.f32 %v270, %v340
    %v344 = vmul.f32 %v343, %v151
    %v345 = vtanh.pop %v344
    %v346 = vmul.f32 %v345, %v151
    %v347 = vadd.f32 %v346, %v152
    %v348 = vmul.f32 %v347, %v257
    %350 = vrot.lane.b32.xlu0 %v347, 64
    %v351 = vpop.permute.xlu0 %350
    %v353 = vmul.f32 %v347, %v351
    %355 = vrot.lane.b32.xlu0 %v353, 32
    %v356 = vpop.permute.xlu0 %355
    %v358 = vadd.f32 %v348, %v356
    %v359 = vtanh.pop %v358
    %361 = vrot.lane.b32.xlu0 %v359, 64
    %v362 = vpop.permute.xlu0 %361
    %v364 = vmul.f32 %v347, %v362
    %366 = vrot.lane.b32.xlu0 %v364, 32
    %v367 = vpop.permute.xlu0 %366
    %369 = vst.msk [vmem:[#allocation3 + $0x1] sm:$0x1] %vm268, %v367
    %v370 = vld [vmem:[#allocation2 + $0x2] sm:$0x1]
    %v371 = vsel %vm160, %v367, 0
    %373 = vmatprep.subr.mxu0 0.0
    %374 = vmatpush1.msra.mxu0 %v153
    %375 = vmatprep.subr.mxu0 0.0
    %376 = vmatpush1.msra.mxu0 %v154
    %377 = vmatprep.subr.mxu0 0.0
    %378 = vmatpush1.msra.mxu0 %v155
    %379 = vmatprep.subr.mxu0 0.0
    %380 = vmatpush1.msra.mxu0 %v156
    %381 = vmatprep.subr.mxu0 0.0
    %382 = vmatpush1.msra.mxu0 0.0
    %383 = vmatprep.subr.mxu0 0.0
    %384 = vmatpush1.msra.mxu0 0.0
    %385 = vmatprep.subr.mxu0 0.0
    %386 = vmatpush1.msra.mxu0 0.0
    %387 = vmatprep.subr.mxu0 0.0
    %388 = vmatpush1.msra.mxu0 0.0
    %389 = vmatprep.subr.mxu0 0.0
    %390 = vmatpush1.msra.mxu0 0.0
    %391 = vmatprep.subr.mxu0 0.0
    %392 = vmatpush1.msra.mxu0 0.0
    %393 = vmatprep.subr.mxu0 0.0
    %394 = vmatpush1.msra.mxu0 0.0
    %395 = vmatprep.subr.mxu0 0.0
    %396 = vmatpush1.msra.mxu0 0.0
    %397 = vmatprep.subr.mxu0 0.0
    %398 = vmatpush1.msra.mxu0 0.0
    %399 = vmatprep.subr.mxu0 0.0
    %400 = vmatpush1.msra.mxu0 0.0
    %401 = vmatprep.subr.mxu0 0.0
    %402 = vmatpush1.msra.mxu0 0.0
    %403 = vmatprep.subr.mxu0 0.0
    %404 = vmatpush1.msra.mxu0 0.0
    %405 = vmatprep.subr.mxu0 0.0
    %406 = vmatpush1.msra.mxu0 0.0
    %407 = vmatprep.subr.mxu0 0.0
    %408 = vmatpush1.msra.mxu0 0.0
    %409 = vmatprep.subr.mxu0 0.0
    %410 = vmatpush1.msra.mxu0 0.0
    %411 = vmatprep.subr.mxu0 0.0
    %412 = vmatpush1.msra.mxu0 0.0
    %413 = vmatprep.subr.mxu0 0.0
    %414 = vmatpush1.msra.mxu0 0.0
    %415 = vmatprep.subr.mxu0 0.0
    %416 = vmatpush1.msra.mxu0 0.0
    %417 = vmatprep.subr.mxu0 0.0
    %418 = vmatpush1.msra.mxu0 0.0
    %419 = vmatprep.subr.mxu0 0.0
    %420 = vmatpush1.msra.mxu0 0.0
    %421 = vmatprep.subr.mxu0 0.0
    %422 = vmatpush1.msra.mxu0 0.0
    %423 = vmatprep.subr.mxu0 0.0
    %424 = vmatpush1.msra.mxu0 0.0
    %425 = vmatprep.subr.mxu0 0.0
    %426 = vmatpush1.msra.mxu0 0.0
    %427 = vmatprep.subr.mxu0 0.0
    %428 = vmatpush1.msra.mxu0 0.0
    %429 = vmatprep.subr.mxu0 0.0
    %430 = vmatpush1.msra.mxu0 0.0
    %431 = vmatprep.subr.mxu0 0.0
    %432 = vmatpush1.msra.mxu0 0.0
    %433 = vmatprep.subr.mxu0 0.0
    %434 = vmatpush1.msra.mxu0 0.0
    %435 = vmatprep.subr.mxu0 0.0
    %436 = vmatpush1.msra.mxu0 0.0
    %437 = vmatprep.mubr.f32.mxu0 0.0
    %438 = vmatmul.mubr.f32.gmra.mrb[0].mxu0 %v371
    %v439 = vpop.f32.mrb[0].mxu0
    %v440 = vadd.f32 0.0, %v439
    %v441 = vpop.f32.mrb[0].mxu0
    %442 = vdwg.mxu0
    %v443 = vadd.f32 %v370, %v440
    %v444 = vmul.f32 %v443, %v151
    %v445 = vtanh.pop %v444
    %v446 = vmul.f32 %v445, %v151
    %v447 = vadd.f32 %v446, %v152
    %v448 = vmul.f32 %v447, %v358
    %450 = vrot.lane.b32.xlu0 %v447, 64
    %v451 = vpop.permute.xlu0 %450
    %v453 = vmul.f32 %v447, %v451
    %455 = vrot.lane.b32.xlu0 %v453, 32
    %v456 = vpop.permute.xlu0 %455
    %v458 = vadd.f32 %v448, %v456
    %v459 = vtanh.pop %v458
    %461 = vrot.lane.b32.xlu0 %v459, 64
    %v462 = vpop.permute.xlu0 %461
    %v464 = vmul.f32 %v447, %v462
    %466 = vrot.lane.b32.xlu0 %v464, 32
    %v467 = vpop.permute.xlu0 %466
    %469 = vst.msk [vmem:[#allocation3 + $0x2] sm:$0x1] %vm268, %v467
    %v470 = vld [vmem:[#allocation2 + $0x3] sm:$0x1]
    %v471 = vsel %vm160, %v467, 0
    %473 = vmatprep.subr.mxu0 0.0
    %474 = vmatpush1.msra.mxu0 %v153
    %475 = vmatprep.subr.mxu0 0.0
    %476 = vmatpush1.msra.mxu0 %v154
    %477 = vmatprep.subr.mxu0 0.0
    %478 = vmatpush1.msra.mxu0 %v155
    %479 = vmatprep.subr.mxu0 0.0
    %480 = vmatpush1.msra.mxu0 %v156
    %481 = vmatprep.subr.mxu0 0.0
    %482 = vmatpush1.msra.mxu0 0.0
    %483 = vmatprep.subr.mxu0 0.0
    %484 = vmatpush1.msra.mxu0 0.0
    %485 = vmatprep.subr.mxu0 0.0
    %486 = vmatpush1.msra.mxu0 0.0
    %487 = vmatprep.subr.mxu0 0.0
    %488 = vmatpush1.msra.mxu0 0.0
    %489 = vmatprep.subr.mxu0 0.0
    %490 = vmatpush1.msra.mxu0 0.0
    %491 = vmatprep.subr.mxu0 0.0
    %492 = vmatpush1.msra.mxu0 0.0
    %493 = vmatprep.subr.mxu0 0.0
    %494 = vmatpush1.msra.mxu0 0.0
    %495 = vmatprep.subr.mxu0 0.0
    %496 = vmatpush1.msra.mxu0 0.0
    %497 = vmatprep.subr.mxu0 0.0
    %498 = vmatpush1.msra.mxu0 0.0
    %499 = vmatprep.subr.mxu0 0.0
    %500 = vmatpush1.msra.mxu0 0.0
    %501 = vmatprep.subr.mxu0 0.0
    %502 = vmatpush1.msra.mxu0 0.0
    %503 = vmatprep.subr.mxu0 0.0
    %504 = vmatpush1.msra.mxu0 0.0
    %505 = vmatprep.subr.mxu0 0.0
    %506 = vmatpush1.msra.mxu0 0.0
    %507 = vmatprep.subr.mxu0 0.0
    %508 = vmatpush1.msra.mxu0 0.0
    %509 = vmatprep.subr.mxu0 0.0
    %510 = vmatpush1.msra.mxu0 0.0
    %511 = vmatprep.subr.mxu0 0.0
    %512 = vmatpush1.msra.mxu0 0.0
    %513 = vmatprep.subr.mxu0 0.0
    %514 = vmatpush1.msra.mxu0 0.0
    %515 = vmatprep.subr.mxu0 0.0
    %516 = vmatpush1.msra.mxu0 0.0
    %517 = vmatprep.subr.mxu0 0.0
    %518 = vmatpush1.msra.mxu0 0.0
    %519 = vmatprep.subr.mxu0 0.0
    %520 = vmatpush1.msra.mxu0 0.0
    %521 = vmatprep.subr.mxu0 0.0
    %522 = vmatpush1.msra.mxu0 0.0
    %523 = vmatprep.subr.mxu0 0.0
    %524 = vmatpush1.msra.mxu0 0.0
    %525 = vmatprep.subr.mxu0 0.0
    %526 = vmatpush1.msra.mxu0 0.0
    %527 = vmatprep.subr.mxu0 0.0
    %528 = vmatpush1.msra.mxu0 0.0
    %529 = vmatprep.subr.mxu0 0.0
    %530 = vmatpush1.msra.mxu0 0.0
    %531 = vmatprep.subr.mxu0 0.0
    %532 = vmatpush1.msra.mxu0 0.0
    %533 = vmatprep.subr.mxu0 0.0
    %534 = vmatpush1.msra.mxu0 0.0
    %535 = vmatprep.subr.mxu0 0.0
    %536 = vmatpush1.msra.mxu0 0.0
    %537 = vmatprep.mubr.f32.mxu0 0.0
    %538 = vmatmul.mubr.f32.gmra.mrb[0].mxu0 %v471
    %v539 = vpop.f32.mrb[0].mxu0
    %v540 = vadd.f32 0.0, %v539
    %v541 = vpop.f32.mrb[0].mxu0
    %542 = vdwg.mxu0
    %v543 = vadd.f32 %v470, %v540
    %v544 = vmul.f32 %v543, %v151
    %v545 = vtanh.pop %v544
    %v546 = vmul.f32 %v545, %v151
    %v547 = vadd.f32 %v546, %v152
    %v548 = vmul.f32 %v547, %v458
    %550 = vrot.lane.b32.xlu0 %v547, 64
    %v551 = vpop.permute.xlu0 %550
    %v553 = vmul.f32 %v547, %v551
    %555 = vrot.lane.b32.xlu0 %v553, 32
    %v556 = vpop.permute.xlu0 %555
    %v558 = vadd.f32 %v548, %v556
    %v559 = vtanh.pop %v558
    %561 = vrot.lane.b32.xlu0 %v559, 64
    %v562 = vpop.permute.xlu0 %561
    %v564 = vmul.f32 %v547, %v562
    %566 = vrot.lane.b32.xlu0 %v564, 32
    %v567 = vpop.permute.xlu0 %566
    %569 = vst.msk [vmem:[#allocation3 + $0x3] sm:$0x1] %vm268, %v567
    %v570 = vld [vmem:[#allocation2 + $0x4] sm:$0x1]
    %v571 = vsel %vm160, %v567, 0
    %573 = vmatprep.subr.mxu0 0.0
    %574 = vmatpush1.msra.mxu0 %v153
    %575 = vmatprep.subr.mxu0 0.0
    %576 = vmatpush1.msra.mxu0 %v154
    %577 = vmatprep.subr.mxu0 0.0
    %578 = vmatpush1.msra.mxu0 %v155
    %579 = vmatprep.subr.mxu0 0.0
    %580 = vmatpush1.msra.mxu0 %v156
    %581 = vmatprep.subr.mxu0 0.0
    %582 = vmatpush1.msra.mxu0 0.0
    %583 = vmatprep.subr.mxu0 0.0
    %584 = vmatpush1.msra.mxu0 0.0
    %585 = vmatprep.subr.mxu0 0.0
    %586 = vmatpush1.msra.mxu0 0.0
    %587 = vmatprep.subr.mxu0 0.0
    %588 = vmatpush1.msra.mxu0 0.0
    %589 = vmatprep.subr.mxu0 0.0
    %590 = vmatpush1.msra.mxu0 0.0
    %591 = vmatprep.subr.mxu0 0.0
    %592 = vmatpush1.msra.mxu0 0.0
    %593 = vmatprep.subr.mxu0 0.0
    %594 = vmatpush1.msra.mxu0 0.0
    %595 = vmatprep.subr.mxu0 0.0
    %596 = vmatpush1.msra.mxu0 0.0
    %597 = vmatprep.subr.mxu0 0.0
    %598 = vmatpush1.msra.mxu0 0.0
    %599 = vmatprep.subr.mxu0 0.0
    %600 = vmatpush1.msra.mxu0 0.0
    %601 = vmatprep.subr.mxu0 0.0
    %602 = vmatpush1.msra.mxu0 0.0
    %603 = vmatprep.subr.mxu0 0.0
    %604 = vmatpush1.msra.mxu0 0.0
    %605 = vmatprep.subr.mxu0 0.0
    %606 = vmatpush1.msra.mxu0 0.0
    %607 = vmatprep.subr.mxu0 0.0
    %608 = vmatpush1.msra.mxu0 0.0
    %609 = vmatprep.subr.mxu0 0.0
    %610 = vmatpush1.msra.mxu0 0.0
    %611 = vmatprep.subr.mxu0 0.0
    %612 = vmatpush1.msra.mxu0 0.0
    %613 = vmatprep.subr.mxu0 0.0
    %614 = vmatpush1.msra.mxu0 0.0
    %615 = vmatprep.subr.mxu0 0.0
    %616 = vmatpush1.msra.mxu0 0.0
    %617 = vmatprep.subr.mxu0 0.0
    %618 = vmatpush1.msra.mxu0 0.0
    %619 = vmatprep.subr.mxu0 0.0
    %620 = vmatpush1.msra.mxu0 0.0
    %621 = vmatprep.subr.mxu0 0.0
    %622 = vmatpush1.msra.mxu0 0.0
    %623 = vmatprep.subr.mxu0 0.0
    %624 = vmatpush1.msra.mxu0 0.0
    %625 = vmatprep.subr.mxu0 0.0
    %626 = vmatpush1.msra.mxu0 0.0
    %627 = vmatprep.subr.mxu0 0.0
    %628 = vmatpush1.msra.mxu0 0.0
    %629 = vmatprep.subr.mxu0 0.0
    %630 = vmatpush1.msra.mxu0 0.0
    %631 = vmatprep.subr.mxu0 0.0
    %632 = vmatpush1.msra.mxu0 0.0
    %633 = vmatprep.subr.mxu0 0.0
    %634 = vmatpush1.msra.mxu0 0.0
    %635 = vmatprep.subr.mxu0 0.0
    %636 = vmatpush1.msra.mxu0 0.0
    %637 = vmatprep.mubr.f32.mxu0 0.0
    %638 = vmatmul.mubr.f32.gmra.mrb[0].mxu0 %v571
    %v639 = vpop.f32.mrb[0].mxu0
    %v640 = vadd.f32 0.0, %v639
    %v641 = vpop.f32.mrb[0].mxu0
    %642 = vdwg.mxu0
    %v643 = vadd.f32 %v570, %v640
    %v644 = vmul.f32 %v643, %v151
    %v645 = vtanh.pop %v644
    %v646 = vmul.f32 %v645, %v151
    %v647 = vadd.f32 %v646, %v152
    %v648 = vmul.f32 %v647, %v558
    %650 = vrot.lane.b32.xlu0 %v647, 64
    %v651 = vpop.permute.xlu0 %650
    %v653 = vmul.f32 %v647, %v651
    %655 = vrot.lane.b32.xlu0 %v653, 32
    %v656 = vpop.permute.xlu0 %655
    %v658 = vadd.f32 %v648, %v656
    %v659 = vtanh.pop %v658
    %661 = vrot.lane.b32.xlu0 %v659, 64
    %v662 = vpop.permute.xlu0 %661
    %v664 = vmul.f32 %v647, %v662
    %666 = vrot.lane.b32.xlu0 %v664, 32
    %v667 = vpop.permute.xlu0 %666
    %669 = vst.msk [vmem:[#allocation3 + $0x4] sm:$0x1] %vm268, %v667
    %v670 = vld [vmem:[#allocation2 + $0x5] sm:$0x1]
    %v671 = vsel %vm160, %v667, 0
    %673 = vmatprep.subr.mxu0 0.0
    %674 = vmatpush1.msra.mxu0 %v153
    %675 = vmatprep.subr.mxu0 0.0
    %676 = vmatpush1.msra.mxu0 %v154
    %677 = vmatprep.subr.mxu0 0.0
    %678 = vmatpush1.msra.mxu0 %v155
    %679 = vmatprep.subr.mxu0 0.0
    %680 = vmatpush1.msra.mxu0 %v156
    %681 = vmatprep.subr.mxu0 0.0
    %682 = vmatpush1.msra.mxu0 0.0
    %683 = vmatprep.subr.mxu0 0.0
    %684 = vmatpush1.msra.mxu0 0.0
    %685 = vmatprep.subr.mxu0 0.0
    %686 = vmatpush1.msra.mxu0 0.0
    %687 = vmatprep.subr.mxu0 0.0
    %688 = vmatpush1.msra.mxu0 0.0
    %689 = vmatprep.subr.mxu0 0.0
    %690 = vmatpush1.msra.mxu0 0.0
    %691 = vmatprep.subr.mxu0 0.0
    %692 = vmatpush1.msra.mxu0 0.0
    %693 = vmatprep.subr.mxu0 0.0
    %694 = vmatpush1.msra.mxu0 0.0
    %695 = vmatprep.subr.mxu0 0.0
    %696 = vmatpush1.msra.mxu0 0.0
    %697 = vmatprep.subr.mxu0 0.0
    %698 = vmatpush1.msra.mxu0 0.0
    %699 = vmatprep.subr.mxu0 0.0
    %700 = vmatpush1.msra.mxu0 0.0
    %701 = vmatprep.subr.mxu0 0.0
    %702 = vmatpush1.msra.mxu0 0.0
    %703 = vmatprep.subr.mxu0 0.0
    %704 = vmatpush1.msra.mxu0 0.0
    %705 = vmatprep.subr.mxu0 0.0
    %706 = vmatpush1.msra.mxu0 0.0
    %707 = vmatprep.subr.mxu0 0.0
    %708 = vmatpush1.msra.mxu0 0.0
    %709 = vmatprep.subr.mxu0 0.0
    %710 = vmatpush1.msra.mxu0 0.0
    %711 = vmatprep.subr.mxu0 0.0
    %712 = vmatpush1.msra.mxu0 0.0
    %713 = vmatprep.subr.mxu0 0.0
    %714 = vmatpush1.msra.mxu0 0.0
    %715 = vmatprep.subr.mxu0 0.0
    %716 = vmatpush1.msra.mxu0 0.0
    %717 = vmatprep.subr.mxu0 0.0
    %718 = vmatpush1.msra.mxu0 0.0
    %719 = vmatprep.subr.mxu0 0.0
    %720 = vmatpush1.msra.mxu0 0.0
    %721 = vmatprep.subr.mxu0 0.0
    %722 = vmatpush1.msra.mxu0 0.0
    %723 = vmatprep.subr.mxu0 0.0
    %724 = vmatpush1.msra.mxu0 0.0
    %725 = vmatprep.subr.mxu0 0.0
    %726 = vmatpush1.msra.mxu0 0.0
    %727 = vmatprep.subr.mxu0 0.0
    %728 = vmatpush1.msra.mxu0 0.0
    %729 = vmatprep.subr.mxu0 0.0
    %730 = vmatpush1.msra.mxu0 0.0
    %731 = vmatprep.subr.mxu0 0.0
    %732 = vmatpush1.msra.mxu0 0.0
    %733 = vmatprep.subr.mxu0 0.0
    %734 = vmatpush1.msra.mxu0 0.0
    %735 = vmatprep.subr.mxu0 0.0
    %736 = vmatpush1.msra.mxu0 0.0
    %737 = vmatprep.mubr.f32.mxu0 0.0
    %738 = vmatmul.mubr.f32.gmra.mrb[0].mxu0 %v671
    %v739 = vpop.f32.mrb[0].mxu0
    %v740 = vadd.f32 0.0, %v739
    %v741 = vpop.f32.mrb[0].mxu0
    %742 = vdwg.mxu0
    %v743 = vadd.f32 %v670, %v740
    %v744 = vmul.f32 %v743, %v151
    %v745 = vtanh.pop %v744
    %v746 = vmul.f32 %v745, %v151
    %v747 = vadd.f32 %v746, %v152
    %v748 = vmul.f32 %v747, %v658
    %750 = vrot.lane.b32.xlu0 %v747, 64
    %v751 = vpop.permute.xlu0 %750
    %v753 = vmul.f32 %v747, %v751
    %755 = vrot.lane.b32.xlu0 %v753, 32
    %v756 = vpop.permute.xlu0 %755
    %v758 = vadd.f32 %v748, %v756
    %v759 = vtanh.pop %v758
    %761 = vrot.lane.b32.xlu0 %v759, 64
    %v762 = vpop.permute.xlu0 %761
    %v764 = vmul.f32 %v747, %v762
    %766 = vrot.lane.b32.xlu0 %v764, 32
    %v767 = vpop.permute.xlu0 %766
    %769 = vst.msk [vmem:[#allocation3 + $0x5] sm:$0x1] %vm268, %v767
    %v770 = vld [vmem:[#allocation2 + $0x6] sm:$0x1]
    %v771 = vsel %vm160, %v767, 0
    %773 = vmatprep.subr.mxu0 0.0
    %774 = vmatpush1.msra.mxu0 %v153
    %775 = vmatprep.subr.mxu0 0.0
    %776 = vmatpush1.msra.mxu0 %v154
    %777 = vmatprep.subr.mxu0 0.0
    %778 = vmatpush1.msra.mxu0 %v155
    %779 = vmatprep.subr.mxu0 0.0
    %780 = vmatpush1.msra.mxu0 %v156
    %781 = vmatprep.subr.mxu0 0.0
    %782 = vmatpush1.msra.mxu0 0.0
    %783 = vmatprep.subr.mxu0 0.0
    %784 = vmatpush1.msra.mxu0 0.0
    %785 = vmatprep.subr.mxu0 0.0
    %786 = vmatpush1.msra.mxu0 0.0
    %787 = vmatprep.subr.mxu0 0.0
    %788 = vmatpush1.msra.mxu0 0.0
    %789 = vmatprep.subr.mxu0 0.0
    %790 = vmatpush1.msra.mxu0 0.0
    %791 = vmatprep.subr.mxu0 0.0
    %792 = vmatpush1.msra.mxu0 0.0
    %793 = vmatprep.subr.mxu0 0.0
    %794 = vmatpush1.msra.mxu0 0.0
    %795 = vmatprep.subr.mxu0 0.0
    %796 = vmatpush1.msra.mxu0 0.0
    %797 = vmatprep.subr.mxu0 0.0
    %798 = vmatpush1.msra.mxu0 0.0
    %799 = vmatprep.subr.mxu0 0.0
    %800 = vmatpush1.msra.mxu0 0.0
    %801 = vmatprep.subr.mxu0 0.0
    %802 = vmatpush1.msra.mxu0 0.0
    %803 = vmatprep.subr.mxu0 0.0
    %804 = vmatpush1.msra.mxu0 0.0
    %805 = vmatprep.subr.mxu0 0.0
    %806 = vmatpush1.msra.mxu0 0.0
    %807 = vmatprep.subr.mxu0 0.0
    %808 = vmatpush1.msra.mxu0 0.0
    %809 = vmatprep.subr.mxu0 0.0
    %810 = vmatpush1.msra.mxu0 0.0
    %811 = vmatprep.subr.mxu0 0.0
    %812 = vmatpush1.msra.mxu0 0.0
    %813 = vmatprep.subr.mxu0 0.0
    %814 = vmatpush1.msra.mxu0 0.0
    %815 = vmatprep.subr.mxu0 0.0
    %816 = vmatpush1.msra.mxu0 0.0
    %817 = vmatprep.subr.mxu0 0.0
    %818 = vmatpush1.msra.mxu0 0.0
    %819 = vmatprep.subr.mxu0 0.0
    %820 = vmatpush1.msra.mxu0 0.0
    %821 = vmatprep.subr.mxu0 0.0
    %822 = vmatpush1.msra.mxu0 0.0
    %823 = vmatprep.subr.mxu0 0.0
    %824 = vmatpush1.msra.mxu0 0.0
    %825 = vmatprep.subr.mxu0 0.0
    %826 = vmatpush1.msra.mxu0 0.0
    %827 = vmatprep.subr.mxu0 0.0
    %828 = vmatpush1.msra.mxu0 0.0
    %829 = vmatprep.subr.mxu0 0.0
    %830 = vmatpush1.msra.mxu0 0.0
    %831 = vmatprep.subr.mxu0 0.0
    %832 = vmatpush1.msra.mxu0 0.0
    %833 = vmatprep.subr.mxu0 0.0
    %834 = vmatpush1.msra.mxu0 0.0
    %835 = vmatprep.subr.mxu0 0.0
    %836 = vmatpush1.msra.mxu0 0.0
    %837 = vmatprep.mubr.f32.mxu0 0.0
    %838 = vmatmul.mubr.f32.gmra.mrb[0].mxu0 %v771
    %v839 = vpop.f32.mrb[0].mxu0
    %v840 = vadd.f32 0.0, %v839
    %v841 = vpop.f32.mrb[0].mxu0
    %842 = vdwg.mxu0
    %v843 = vadd.f32 %v770, %v840
    %v844 = vmul.f32 %v843, %v151
    %v845 = vtanh.pop %v844
    %v846 = vmul.f32 %v845, %v151
    %v847 = vadd.f32 %v846, %v152
    %v848 = vmul.f32 %v847, %v758
    %850 = vrot.lane.b32.xlu0 %v847, 64
    %v851 = vpop.permute.xlu0 %850
    %v853 = vmul.f32 %v847, %v851
    %855 = vrot.lane.b32.xlu0 %v853, 32
    %v856 = vpop.permute.xlu0 %855
    %v858 = vadd.f32 %v848, %v856
    %v859 = vtanh.pop %v858
    %861 = vrot.lane.b32.xlu0 %v859, 64
    %v862 = vpop.permute.xlu0 %861
    %v864 = vmul.f32 %v847, %v862
    %866 = vrot.lane.b32.xlu0 %v864, 32
    %v867 = vpop.permute.xlu0 %866
    %869 = vst.msk [vmem:[#allocation3 + $0x6] sm:$0x1] %vm268, %v867
    %v870 = vld [vmem:[#allocation2 + $0x7] sm:$0x1]
    %v871 = vsel %vm160, %v867, 0
    %873 = vmatprep.subr.mxu0 0.0
    %874 = vmatpush1.msra.mxu0 %v153
    %875 = vmatprep.subr.mxu0 0.0
    %876 = vmatpush1.msra.mxu0 %v154
    %877 = vmatprep.subr.mxu0 0.0
    %878 = vmatpush1.msra.mxu0 %v155
    %879 = vmatprep.subr.mxu0 0.0
    %880 = vmatpush1.msra.mxu0 %v156
    %881 = vmatprep.subr.mxu0 0.0
    %882 = vmatpush1.msra.mxu0 0.0
    %883 = vmatprep.subr.mxu0 0.0
    %884 = vmatpush1.msra.mxu0 0.0
    %885 = vmatprep.subr.mxu0 0.0
    %886 = vmatpush1.msra.mxu0 0.0
    %887 = vmatprep.subr.mxu0 0.0
    %888 = vmatpush1.msra.mxu0 0.0
    %889 = vmatprep.subr.mxu0 0.0
    %890 = vmatpush1.msra.mxu0 0.0
    %891 = vmatprep.subr.mxu0 0.0
    %892 = vmatpush1.msra.mxu0 0.0
    %893 = vmatprep.subr.mxu0 0.0
    %894 = vmatpush1.msra.mxu0 0.0
    %895 = vmatprep.subr.mxu0 0.0
    %896 = vmatpush1.msra.mxu0 0.0
    %897 = vmatprep.subr.mxu0 0.0
    %898 = vmatpush1.msra.mxu0 0.0
    %899 = vmatprep.subr.mxu0 0.0
    %900 = vmatpush1.msra.mxu0 0.0
    %901 = vmatprep.subr.mxu0 0.0
    %902 = vmatpush1.msra.mxu0 0.0
    %903 = vmatprep.subr.mxu0 0.0
    %904 = vmatpush1.msra.mxu0 0.0
    %905 = vmatprep.subr.mxu0 0.0
    %906 = vmatpush1.msra.mxu0 0.0
    %907 = vmatprep.subr.mxu0 0.0
    %908 = vmatpush1.msra.mxu0 0.0
    %909 = vmatprep.subr.mxu0 0.0
    %910 = vmatpush1.msra.mxu0 0.0
    %911 = vmatprep.subr.mxu0 0.0
    %912 = vmatpush1.msra.mxu0 0.0
    %913 = vmatprep.subr.mxu0 0.0
    %914 = vmatpush1.msra.mxu0 0.0
    %915 = vmatprep.subr.mxu0 0.0
    %916 = vmatpush1.msra.mxu0 0.0
    %917 = vmatprep.subr.mxu0 0.0
    %918 = vmatpush1.msra.mxu0 0.0
    %919 = vmatprep.subr.mxu0 0.0
    %920 = vmatpush1.msra.mxu0 0.0
    %921 = vmatprep.subr.mxu0 0.0
    %922 = vmatpush1.msra.mxu0 0.0
    %923 = vmatprep.subr.mxu0 0.0
    %924 = vmatpush1.msra.mxu0 0.0
    %925 = vmatprep.subr.mxu0 0.0
    %926 = vmatpush1.msra.mxu0 0.0
    %927 = vmatprep.subr.mxu0 0.0
    %928 = vmatpush1.msra.mxu0 0.0
    %929 = vmatprep.subr.mxu0 0.0
    %930 = vmatpush1.msra.mxu0 0.0
    %931 = vmatprep.subr.mxu0 0.0
    %932 = vmatpush1.msra.mxu0 0.0
    %933 = vmatprep.subr.mxu0 0.0
    %934 = vmatpush1.msra.mxu0 0.0
    %935 = vmatprep.subr.mxu0 0.0
    %936 = vmatpush1.msra.mxu0 0.0
    %937 = vmatprep.mubr.f32.mxu0 0.0
    %938 = vmatmul.mubr.f32.gmra.mrb[0].mxu0 %v871
    %v939 = vpop.f32.mrb[0].mxu0
    %v940 = vadd.f32 0.0, %v939
    %v941 = vpop.f32.mrb[0].mxu0
    %942 = vdwg.mxu0
    %v943 = vadd.f32 %v870, %v940
    %v944 = vmul.f32 %v943, %v151
    %v945 = vtanh.pop %v944
    %v946 = vmul.f32 %v945, %v151
    %v947 = vadd.f32 %v946, %v152
    %v948 = vmul.f32 %v947, %v858
    %950 = vrot.lane.b32.xlu0 %v947, 64
    %v951 = vpop.permute.xlu0 %950
    %v953 = vmul.f32 %v947, %v951
    %955 = vrot.lane.b32.xlu0 %v953, 32
    %v956 = vpop.permute.xlu0 %955
    %v958 = vadd.f32 %v948, %v956
    %v959 = vtanh.pop %v958
    %961 = vrot.lane.b32.xlu0 %v959, 64
    %v962 = vpop.permute.xlu0 %961
    %v964 = vmul.f32 %v947, %v962
    %966 = vrot.lane.b32.xlu0 %v964, 32
    %v967 = vpop.permute.xlu0 %966
    %969 = vst.msk [vmem:[#allocation3 + $0x7] sm:$0x1] %vm268, %v967
    %970 = vst.msk [vmem:[%s9] sm:$0x1] %vm268, %v967
    %972 = vrot.lane.b32.xlu0 %v958, 96
    %v973 = vpop.permute.xlu0 %972
    %975 = vst.msk [vmem:[%s10] sm:$0x1] %vm268, %v973
    %v976 = vld [vmem:[#allocation3] sm:$0xff]
    %v977 = vld [vmem:[#allocation7] sm:$0xff]
    %v978 = vld [vmem:[#allocation7 + $0x8] sm:$0xff]
    %v979 = vld [vmem:[#allocation7 + $0x10] sm:$0xff]
    %v980 = vld [vmem:[#allocation7 + $0x18] sm:$0xff]
    %v981 = vld [vmem:[%s7] sm:$0x1]
    %v983 = vlaneseq
    %v984 = vshrl.u32 %v983, 7
    %v985 = vsub.s32 0, %v984
    %v986 = vrot.slane %v981, %v985
    %v989 = vsel %vm160, %v976, 0
    %991 = vmatprep.subr.mxu0 0.0
    %992 = vmatpush1.msra.mxu0 %v977
    %993 = vmatprep.subr.mxu0 0.0
    %994 = vmatpush1.msra.mxu0 %v978
    %995 = vmatprep.subr.mxu0 0.0
    %996 = vmatpush1.msra.mxu0 %v979
    %997 = vmatprep.subr.mxu0 0.0
    %998 = vmatpush1.msra.mxu0 %v980
    %999 = vmatprep.subr.mxu0 0.0
    %1000 = vmatpush1.msra.mxu0 0.0
    %1001 = vmatprep.subr.mxu0 0.0
    %1002 = vmatpush1.msra.mxu0 0.0
    %1003 = vmatprep.subr.mxu0 0.0
    %1004 = vmatpush1.msra.mxu0 0.0
    %1005 = vmatprep.subr.mxu0 0.0
    %1006 = vmatpush1.msra.mxu0 0.0
    %1007 = vmatprep.subr.mxu0 0.0
    %1008 = vmatpush1.msra.mxu0 0.0
    %1009 = vmatprep.subr.mxu0 0.0
    %1010 = vmatpush1.msra.mxu0 0.0
    %1011 = vmatprep.subr.mxu0 0.0
    %1012 = vmatpush1.msra.mxu0 0.0
    %1013 = vmatprep.subr.mxu0 0.0
    %1014 = vmatpush1.msra.mxu0 0.0
    %1015 = vmatprep.subr.mxu0 0.0
    %1016 = vmatpush1.msra.mxu0 0.0
    %1017 = vmatprep.subr.mxu0 0.0
    %1018 = vmatpush1.msra.mxu0 0.0
    %1019 = vmatprep.subr.mxu0 0.0
    %1020 = vmatpush1.msra.mxu0 0.0
    %1021 = vmatprep.subr.mxu0 0.0
    %1022 = vmatpush1.msra.mxu0 0.0
    %1023 = vmatprep.subr.mxu0 0.0
    %1024 = vmatpush1.msra.mxu0 0.0
    %1025 = vmatprep.subr.mxu0 0.0
    %1026 = vmatpush1.msra.mxu0 0.0
    %1027 = vmatprep.subr.mxu0 0.0
    %1028 = vmatpush1.msra.mxu0 0.0
    %1029 = vmatprep.subr.mxu0 0.0
    %1030 = vmatpush1.msra.mxu0 0.0
    %1031 = vmatprep.subr.mxu0 0.0
    %1032 = vmatpush1.msra.mxu0 0.0
    %1033 = vmatprep.subr.mxu0 0.0
    %1034 = vmatpush1.msra.mxu0 0.0
    %1035 = vmatprep.subr.mxu0 0.0
    %1036 = vmatpush1.msra.mxu0 0.0
    %1037 = vmatprep.subr.mxu0 0.0
    %1038 = vmatpush1.msra.mxu0 0.0
    %1039 = vmatprep.subr.mxu0 0.0
    %1040 = vmatpush1.msra.mxu0 0.0
    %1041 = vmatprep.subr.mxu0 0.0
    %1042 = vmatpush1.msra.mxu0 0.0
    %1043 = vmatprep.subr.mxu0 0.0
    %1044 = vmatpush1.msra.mxu0 0.0
    %1045 = vmatprep.subr.mxu0 0.0
    %1046 = vmatpush1.msra.mxu0 0.0
    %1047 = vmatprep.subr.mxu0 0.0
    %1048 = vmatpush1.msra.mxu0 0.0
    %1049 = vmatprep.subr.mxu0 0.0
    %1050 = vmatpush1.msra.mxu0 0.0
    %1051 = vmatprep.subr.mxu0 0.0
    %1052 = vmatpush1.msra.mxu0 0.0
    %1053 = vmatprep.subr.mxu0 0.0
    %1054 = vmatpush1.msra.mxu0 0.0
    %1055 = vmatprep.mubr.f32.mxu0 0.0
    %1056 = vmatmul.mubr.f32.gmra.mrb[0].mxu0 %v989
    %v1057 = vpop.f32.mrb[0].mxu0
    %v1058 = vadd.f32 %v986, %v1057
    %v1059 = vpop.f32.mrb[0].mxu0
    %1060 = vdwg.mxu0
    %v1061 = vtanh.pop %v1058
    %1062 = vst [vmem:[#allocation9] sm:$0xff] %v1061
    // Predicated region
    $region42: #{run.1} parent=1 // pred_check
      _
    $region43: #{run.1} parent=1 // pred_check_branch
      %1064 = sbr.rel (0) target = $region45
    $region44: #{run.1} parent=1 // pred_region
      %s1066 = ssub.s32 128, 128
      %1067 = vsyncadd [#allocation6], %s1066
      %s1069 = sshll.u32 [#allocation9], 4
      %s1070 = int_to_ptr.vmem [resolvable:$true] %s1069
      %1072 = dma.vmem_to_hbm [thread:$0]  %s1070, 128, %s8, [#allocation6]
    $region45: #{run.1} parent=1 // pred_fallthru
      _
    // Predicated region
    $region46: #{run.1} parent=1 // pred_check
      _
    $region47: #{run.1} parent=1 // pred_check_branch
      %1074 = sbr.rel (0) target = $region49
    $region48: #{run.1} parent=1 // pred_region
      _
    $region49: #{run.1} parent=1 // pred_fallthru
      _
    // Predicated region
    $region50: #{run.1} parent=1 // pred_check
      _
    $region51: #{run.1} parent=1 // pred_check_branch
      %1076 = sbr.rel (0) target = $region53
    $region52: #{run.1} parent=1 // pred_region
      _
    $region53: #{run.1} parent=1 // pred_fallthru
      _
    // Predicated region
    $region54: #{run.1} parent=1 // pred_check
      _
    $region55: #{run.1} parent=1 // pred_check_branch
      %1078 = sbr.rel (0) target = $region57
    $region56: #{run.1} parent=1 // pred_region
      %1079 = dma.done [#allocation6], 128
    $region57: #{run.1} parent=1 // pred_fallthru
      _
    // Predicated region
    $region58: #{run.1} parent=1 // pred_check
      _
    $region59: #{run.1} parent=1 // pred_check_branch
      %1081 = sbr.rel (0) target = $region61
    $region60: #{run.1} parent=1 // pred_region
      _
    $region61: #{run.1} parent=1 // pred_fallthru
      _
    // Predicated region
    $region62: #{run.1} parent=1 // pred_check
      _
    $region63: #{run.1} parent=1 // pred_check_branch
      %1083 = sbr.rel (0) target = $region65
    $region64: #{run.1} parent=1 // pred_region
      _
    $region65: #{run.1} parent=1 // pred_fallthru
      _
    %1084 = vsyncpa [#allocation5], 1
    %1085 = vsyncpa [#allocation8], 1
    %1086 = vsyncpa [#allocation6], 1

</llo_original>
